<compile_context>
chip_gen: v7x
topology: tpu7x:2x2x1
jax: 0.10.0
libtpu: 0.0.40
codegen_flags: <defaults>
</compile_context>

<pallas_src>
import functools

import numpy as np

import jax
import jax.numpy as jnp
from jax.experimental import pallas as pl
from jax.experimental.pallas import tpu as pltpu

EPS = 1e-5  # torch.nn.InstanceNorm2d default


def _conv_block_kernel(*refs, H, W, nb, residual):
    if nb > 1:
        (x_ref, w_ref, mask_ref, g_ref, beta_ref,
         pool_ref, bcast_ref, o_ref) = refs
    else:
        x_ref, w_ref, mask_ref, g_ref, beta_ref, o_ref = refs

    HW = H * W
    L = nb * HW
    Cout = o_ref.shape[1]

    # Pack this step's nb images along the lane axis: (Cin_pad, nb*HW).  Each
    # image chunk is HW lanes (multiple of 128), so the concat is an aligned
    # copy; nb == 1 is a no-op.
    imgs = [x_ref[i].astype(jnp.float32) for i in range(nb)]
    xcat = imgs[0] if nb == 1 else jnp.concatenate(imgs, axis=1)

    # im2col: 9 taps via circular lane rolls (XLU) + one precomputed
    # border-mask multiply per tap.  Lanes that wrap (around an image or the
    # whole slab) correspond exactly to out-of-image taps, which the mask
    # zeroes.  The centre tap (dy=dx=0) is always valid.
    taps = []
    for kh in range(3):
        for kw in range(3):
            dy, dx = kh - 1, kw - 1
            s = dy * W + dx
            if s == 0:
                taps.append(xcat)
                continue
            rolled = pltpu.roll(xcat, (-s) % L, 1)          # y[p] = x[p + s]
            m = mask_ref[pl.ds(kh * 3 + kw, 1), :]          # (1, L)
            taps.append(rolled * m)
    slab = jnp.concatenate(taps, axis=0)                    # (9*Cin_pad, L)

    # 3x3 conv (+ fused 1x1 residual rows) in one MXU matmul, f32 accumulate.
    acc = jnp.dot(w_ref[...], slab, preferred_element_type=jnp.float32)
    conv_out = acc[:Cout, :]
    # Conv bias intentionally omitted: InstanceNorm's mean subtraction cancels
    # any per-channel constant exactly.

    # InstanceNorm2d (per image, per channel) on the live f32 accumulator.
    if nb == 1:
        mean = jnp.mean(conv_out, axis=1, keepdims=True)
        cen = conv_out - mean
        var = jnp.mean(cen * cen, axis=1, keepdims=True)     # biased variance
        out = cen * jax.lax.rsqrt(var + EPS)
    else:
        # Per-image stats without any lane<->sublane reshape: tiny segment
        # matmuls. pool (L, nb) = per-image averaging, bcast (nb, L) = one-hot.
        pool = pool_ref[...]
        bcast = bcast_ref[...]
        mean = jnp.dot(conv_out, pool, preferred_element_type=jnp.float32)
        cen = conv_out - jnp.dot(mean, bcast,
                                 preferred_element_type=jnp.float32)
        var = jnp.dot(cen * cen, pool, preferred_element_type=jnp.float32)
        rstd = jax.lax.rsqrt(var + EPS)
        out = cen * jnp.dot(rstd, bcast, preferred_element_type=jnp.float32)

    out = out * g_ref[...] + beta_ref[...]
    out = jnp.maximum(out, 0.0)

    if residual:
        out = out + acc[Cout:, :]                            # fused 1x1 conv

    for i in range(nb):
        o_ref[i] = out[:, i * HW:(i + 1) * HW].astype(o_ref.dtype)


def conv2d_block(x_nchw, params, *, residual=False, images_per_step=None):
    """Forward pass of Conv2D_Block.

    x_nchw: (N, Cin, H, W) float32 (PyTorch layout)
    params: dict with 'w' (Cout,Cin,3,3), 'b' (Cout,), 'gamma' (Cout,),
            'beta' (Cout,), and (if residual) 'w_ds' (Cout,Cin,1,1)
    images_per_step: images packed per grid step along the lane axis
            (None -> fold as much as possible while keeping >= 2 grid steps,
             so both TensorCores stay busy on v7x).
    returns (N, Cout, H, W)
    """
    N, Cin, H, W = x_nchw.shape
    w = params["w"]
    Cout = w.shape[0]
    HW = H * W

    if images_per_step is None:
        if N <= 1:
            images_per_step = 1
        else:
            images_per_step = max(d for d in range(1, N + 1)
                                  if N % d == 0 and N // d >= 2)
    nb = images_per_step
    assert N % nb == 0, "images_per_step must divide the batch size"
    L = nb * HW

    # Pad channels to a multiple of 8 sublanes so the in-kernel K-concat of
    # the 9 taps is tile-aligned (no sublane repacking).
    Cin_pad = ((Cin + 7) // 8) * 8
    x_flat = x_nchw.reshape(N, Cin, HW)
    if Cin_pad != Cin:
        x_flat = jnp.pad(x_flat, ((0, 0), (0, Cin_pad - Cin), (0, 0)))

    # Conv weight (Cout, Cin, 3, 3) -> (Cout, 9*Cin_pad), K ordered
    # (kh, kw, ci) to match the im2col slab; padded channels get zero columns.
    w_k = jnp.transpose(w, (0, 2, 3, 1)).astype(jnp.float32)  # (Cout,3,3,Cin)
    if Cin_pad != Cin:
        w_k = jnp.pad(w_k, ((0, 0), (0, 0), (0, 0), (0, Cin_pad - Cin)))
    w_main = w_k.reshape(Cout, 9 * Cin_pad)
    if residual:
        # Fuse the 1x1 downsample as extra output rows, non-zero only at the
        # centre-tap columns.
        w_ds = params["w_ds"][:, :, 0, 0].astype(jnp.float32)  # (Cout, Cin)
        w_ds_big = jnp.zeros((Cout, 9 * Cin_pad), jnp.float32)
        w_ds_big = w_ds_big.at[:, 4 * Cin_pad:4 * Cin_pad + Cin].set(w_ds)
        w_big = jnp.concatenate([w_main, w_ds_big], axis=0)    # (2*Cout, K)
    else:
        w_big = w_main
    Ct = w_big.shape[0]

    # Host-precomputed border masks: one row per tap, periodic per image.
    hh = np.arange(HW) // W
    ww = np.arange(HW) % W
    rows = []
    for kh in range(3):
        for kw in range(3):
            dy, dx = kh - 1, kw - 1
            valid = ((hh + dy >= 0) & (hh + dy < H) &
                     (ww + dx >= 0) & (ww + dx < W))
            rows.append(valid.astype(np.float32))
    masks = jnp.asarray(np.tile(np.stack(rows, 0), (1, nb)))   # (9, L)

    g2 = params["gamma"].reshape(Cout, 1).astype(jnp.float32)
    b2 = params["beta"].reshape(Cout, 1).astype(jnp.float32)

    inputs = [x_flat, w_big, masks, g2, b2]
    in_specs = [
        pl.BlockSpec((nb, Cin_pad, HW), lambda g: (g, 0, 0)),
        pl.BlockSpec((Ct, 9 * Cin_pad), lambda g: (0, 0)),
        pl.BlockSpec((9, L), lambda g: (0, 0)),
        pl.BlockSpec((Cout, 1), lambda g: (0, 0)),
        pl.BlockSpec((Cout, 1), lambda g: (0, 0)),
    ]
    if nb > 1:
        # Segment matrices for per-image InstanceNorm stats.
        seg = np.repeat(np.arange(nb), HW)
        pool = jnp.asarray(
            (seg[:, None] == np.arange(nb)[None, :]).astype(np.float32) / HW)
        bcast = jnp.asarray(
            (seg[None, :] == np.arange(nb)[:, None]).astype(np.float32))
        inputs += [pool, bcast]
        in_specs += [pl.BlockSpec((L, nb), lambda g: (0, 0)),
                     pl.BlockSpec((nb, L), lambda g: (0, 0))]

    kernel = functools.partial(_conv_block_kernel, H=H, W=W, nb=nb,
                               residual=residual)

    out_flat = pl.pallas_call(
        kernel,
        out_shape=jax.ShapeDtypeStruct((N, Cout, HW), x_nchw.dtype),
        grid_spec=pltpu.PrefetchScalarGridSpec(
            num_scalar_prefetch=0,
            grid=(N // nb,),
            in_specs=in_specs,
            out_specs=pl.BlockSpec((nb, Cout, HW), lambda g: (g, 0, 0)),
        ),
        compiler_params=pltpu.CompilerParams(
            dimension_semantics=("parallel",)),
    )(*inputs)

    # (N, Cout, H*W) -> NCHW is a free reshape (no transpose needed).
    return out_flat.reshape(N, Cout, H, W)


def _reference(x_nchw, params, *, residual=False):
    """Pure-JAX reference (mirrors the PyTorch module) for validation."""
    w = params["w"]
    out = jax.lax.conv_general_dilated(
        x_nchw, w, window_strides=(1, 1), padding=((1, 1), (1, 1)),
        dimension_numbers=("NCHW", "OIHW", "NCHW"))
    out = out + params["b"][None, :, None, None]
    mean = jnp.mean(out, axis=(2, 3), keepdims=True)
    var = jnp.var(out, axis=(2, 3), keepdims=True)
    out = (out - mean) * jax.lax.rsqrt(var + EPS)
    out = out * params["gamma"][None, :, None, None] + \
        params["beta"][None, :, None, None]
    out = jnp.maximum(out, 0.0)
    if residual:
        ds = jax.lax.conv_general_dilated(
            x_nchw, params["w_ds"], window_strides=(1, 1), padding="VALID",
            dimension_numbers=("NCHW", "OIHW", "NCHW"))
        out = out + ds
    return out


if __name__ == "__main__":
    # Small, module-consistent shapes: batch=2, in_feat=4, out_feat=8, 16x16.
    N, Cin, Cout, H, W = 2, 4, 8, 16, 16
    key = jax.random.PRNGKey(0)
    k_x, k_w, k_b, k_g, k_bt, k_ds = jax.random.split(key, 6)

    x = jax.random.normal(k_x, (N, Cin, H, W), jnp.float32)
    params = {
        "w": 0.1 * jax.random.normal(k_w, (Cout, Cin, 3, 3), jnp.float32),
        "b": 0.1 * jax.random.normal(k_b, (Cout,), jnp.float32),
        "gamma": 1.0 + 0.1 * jax.random.normal(k_g, (Cout,), jnp.float32),
        "beta": 0.1 * jax.random.normal(k_bt, (Cout,), jnp.float32),
        "w_ds": 0.1 * jax.random.normal(k_ds, (Cout, Cin, 1, 1), jnp.float32),
    }

    ref_plain = _reference(x, params, residual=False)
    ref_res = _reference(x, params, residual=True)

    # Exercise: default (1 image/step, 2 grid steps -> both v7x TCs busy) and
    # whole-batch-per-step (fattened MXU N dim, segment-matmul IN stats).
    for nb in (None, 2):
        out_plain = jax.block_until_ready(
            conv2d_block(x, params, residual=False, images_per_step=nb))
        out_res = jax.block_until_ready(
            conv2d_block(x, params, residual=True, images_per_step=nb))
        assert out_plain.shape == (N, Cout, H, W)
        assert out_res.shape == (N, Cout, H, W)
        assert jnp.allclose(out_plain, ref_plain, atol=1e-4, rtol=1e-4)
        assert jnp.allclose(out_res, ref_res, atol=1e-4, rtol=1e-4)

    print("KERNEL_OK")
</pallas_src>

<mosaic_0001>
module attributes {stable_mosaic.version = 11 : i64} {
  func.func @_conv_block_kernel(%arg0: i32, %arg1: memref<1x8x256xf32, #tpu.memory_space<vmem>>, %arg2: memref<8x72xf32, #tpu.memory_space<vmem>>, %arg3: memref<9x256xf32, #tpu.memory_space<vmem>>, %arg4: memref<8x1xf32, #tpu.memory_space<vmem>>, %arg5: memref<8x1xf32, #tpu.memory_space<vmem>>, %arg6: memref<1x8x256xf32, #tpu.memory_space<vmem>>) attributes {dimension_semantics = [#tpu.dimension_semantics<parallel>], iteration_bounds = array<i64: 2>, scalar_prefetch = 0 : i64, scratch_operands = 0 : i64, tpu.core_type = #tpu.core_type<tc>, window_params = [{transform_indices = @transform_0, window_bounds = array<i64: 1, 8, 256>}, {pipeline_mode = #tpu.pipeline_mode<synchronous>, transform_indices = @transform_1, window_bounds = array<i64: 8, 72>}, {pipeline_mode = #tpu.pipeline_mode<synchronous>, transform_indices = @transform_2, window_bounds = array<i64: 9, 256>}, {pipeline_mode = #tpu.pipeline_mode<synchronous>, transform_indices = @transform_3, window_bounds = array<i64: 8, 1>}, {pipeline_mode = #tpu.pipeline_mode<synchronous>, transform_indices = @transform_4, window_bounds = array<i64: 8, 1>}, {transform_indices = @transform_5, window_bounds = array<i64: 1, 8, 256>}]} {
    %c0 = arith.constant 0 : index
    %c0_0 = arith.constant 0 : index
    %c0_1 = arith.constant 0 : index
    %0 = vector.load %arg1[%c0, %c0_0, %c0_1] : memref<1x8x256xf32, #tpu.memory_space<vmem>>, vector<1x8x256xf32>
    %1 = vector.shape_cast %0 : vector<1x8x256xf32> to vector<8x256xf32>
    %c17_i32 = arith.constant 17 : i32
    %2 = tpu.dynamic_rotate %1 by %c17_i32 dim 1 : vector<8x256xf32>, i32 -> vector<8x256xf32>
    %c0_2 = arith.constant 0 : index
    %c0_3 = arith.constant 0 : index
    %3 = vector.load %arg3[%c0_2, %c0_3] : memref<9x256xf32, #tpu.memory_space<vmem>>, vector<1x256xf32>
    %4 = vector.broadcast %3 : vector<1x256xf32> to vector<8x256xf32>
    %5 = arith.mulf %2, %4 : vector<8x256xf32>
    %c16_i32 = arith.constant 16 : i32
    %6 = tpu.dynamic_rotate %1 by %c16_i32 dim 1 : vector<8x256xf32>, i32 -> vector<8x256xf32>
    %c1 = arith.constant 1 : index
    %c0_4 = arith.constant 0 : index
    %7 = vector.load %arg3[%c1, %c0_4] : memref<9x256xf32, #tpu.memory_space<vmem>>, vector<1x256xf32>
    %8 = vector.broadcast %7 : vector<1x256xf32> to vector<8x256xf32>
    %9 = arith.mulf %6, %8 : vector<8x256xf32>
    %c15_i32 = arith.constant 15 : i32
    %10 = tpu.dynamic_rotate %1 by %c15_i32 dim 1 : vector<8x256xf32>, i32 -> vector<8x256xf32>
    %c2 = arith.constant 2 : index
    %c0_5 = arith.constant 0 : index
    %11 = vector.load %arg3[%c2, %c0_5] : memref<9x256xf32, #tpu.memory_space<vmem>>, vector<1x256xf32>
    %12 = vector.broadcast %11 : vector<1x256xf32> to vector<8x256xf32>
    %13 = arith.mulf %10, %12 : vector<8x256xf32>
    %c1_i32 = arith.constant 1 : i32
    %14 = tpu.dynamic_rotate %1 by %c1_i32 dim 1 : vector<8x256xf32>, i32 -> vector<8x256xf32>
    %c3 = arith.constant 3 : index
    %c0_6 = arith.constant 0 : index
    %15 = vector.load %arg3[%c3, %c0_6] : memref<9x256xf32, #tpu.memory_space<vmem>>, vector<1x256xf32>
    %16 = vector.broadcast %15 : vector<1x256xf32> to vector<8x256xf32>
    %17 = arith.mulf %14, %16 : vector<8x256xf32>
    %c255_i32 = arith.constant 255 : i32
    %18 = tpu.dynamic_rotate %1 by %c255_i32 dim 1 : vector<8x256xf32>, i32 -> vector<8x256xf32>
    %c5 = arith.constant 5 : index
    %c0_7 = arith.constant 0 : index
    %19 = vector.load %arg3[%c5, %c0_7] : memref<9x256xf32, #tpu.memory_space<vmem>>, vector<1x256xf32>
    %20 = vector.broadcast %19 : vector<1x256xf32> to vector<8x256xf32>
    %21 = arith.mulf %18, %20 : vector<8x256xf32>
    %c241_i32 = arith.constant 241 : i32
    %22 = tpu.dynamic_rotate %1 by %c241_i32 dim 1 : vector<8x256xf32>, i32 -> vector<8x256xf32>
    %c6 = arith.constant 6 : index
    %c0_8 = arith.constant 0 : index
    %23 = vector.load %arg3[%c6, %c0_8] : memref<9x256xf32, #tpu.memory_space<vmem>>, vector<1x256xf32>
    %24 = vector.broadcast %23 : vector<1x256xf32> to vector<8x256xf32>
    %25 = arith.mulf %22, %24 : vector<8x256xf32>
    %c240_i32 = arith.constant 240 : i32
    %26 = tpu.dynamic_rotate %1 by %c240_i32 dim 1 : vector<8x256xf32>, i32 -> vector<8x256xf32>
    %c7 = arith.constant 7 : index
    %c0_9 = arith.constant 0 : index
    %27 = vector.load %arg3[%c7, %c0_9] : memref<9x256xf32, #tpu.memory_space<vmem>>, vector<1x256xf32>
    %28 = vector.broadcast %27 : vector<1x256xf32> to vector<8x256xf32>
    %29 = arith.mulf %26, %28 : vector<8x256xf32>
    %c239_i32 = arith.constant 239 : i32
    %30 = tpu.dynamic_rotate %1 by %c239_i32 dim 1 : vector<8x256xf32>, i32 -> vector<8x256xf32>
    %c8 = arith.constant 8 : index
    %c0_10 = arith.constant 0 : index
    %31 = vector.load %arg3[%c8, %c0_10] : memref<9x256xf32, #tpu.memory_space<vmem>>, vector<1x256xf32>
    %32 = vector.broadcast %31 : vector<1x256xf32> to vector<8x256xf32>
    %33 = arith.mulf %30, %32 : vector<8x256xf32>
    %34 = tpu.concatenate %5, %9, %13, %17, %1, %21, %25, %29, %33 in 0 : vector<8x256xf32>, vector<8x256xf32>, vector<8x256xf32>, vector<8x256xf32>, vector<8x256xf32>, vector<8x256xf32>, vector<8x256xf32>, vector<8x256xf32>, vector<8x256xf32> -> vector<72x256xf32>
    %c0_11 = arith.constant 0 : index
    %c0_12 = arith.constant 0 : index
    %35 = vector.load %arg2[%c0_11, %c0_12] : memref<8x72xf32, #tpu.memory_space<vmem>>, vector<8x72xf32>
    %cst = arith.constant dense<0.000000e+00> : vector<8x256xf32>
    %36 = tpu.matmul %35, %34, %cst {dimension_numbers = #tpu.dot_dimension_numbers<[1], [0], [0], [1], [0, 0, 1, 1], [], []>} : vector<8x72xf32>, vector<72x256xf32>, vector<8x256xf32> -> vector<8x256xf32>
    %cst_13 = arith.constant dense<0.000000e+00> : vector<8xf32>
    %37 = vector.multi_reduction <add>, %36, %cst_13 [1] : vector<8x256xf32> to vector<8xf32>
    %38 = vector.shape_cast %37 : vector<8xf32> to vector<8x1xf32>
    %cst_14 = arith.constant 2.560000e+02 : f32
    %39 = vector.broadcast %cst_14 : f32 to vector<8x1xf32>
    %40 = arith.divf %38, %39 : vector<8x1xf32>
    %41 = vector.broadcast %40 : vector<8x1xf32> to vector<8x256xf32>
    %42 = arith.subf %36, %41 : vector<8x256xf32>
    %43 = arith.mulf %42, %42 : vector<8x256xf32>
    %cst_15 = arith.constant dense<0.000000e+00> : vector<8xf32>
    %44 = vector.multi_reduction <add>, %43, %cst_15 [1] : vector<8x256xf32> to vector<8xf32>
    %45 = vector.shape_cast %44 : vector<8xf32> to vector<8x1xf32>
    %cst_16 = arith.constant 2.560000e+02 : f32
    %46 = vector.broadcast %cst_16 : f32 to vector<8x1xf32>
    %47 = arith.divf %45, %46 : vector<8x1xf32>
    %cst_17 = arith.constant 9.99999974E-6 : f32
    %48 = vector.broadcast %cst_17 : f32 to vector<8x1xf32>
    %49 = arith.addf %47, %48 : vector<8x1xf32>
    %50 = math.rsqrt %49 : vector<8x1xf32>
    %51 = vector.broadcast %50 : vector<8x1xf32> to vector<8x256xf32>
    %52 = arith.mulf %42, %51 : vector<8x256xf32>
    %c0_18 = arith.constant 0 : index
    %c0_19 = arith.constant 0 : index
    %53 = vector.load %arg4[%c0_18, %c0_19] : memref<8x1xf32, #tpu.memory_space<vmem>>, vector<8x1xf32>
    %54 = vector.broadcast %53 : vector<8x1xf32> to vector<8x256xf32>
    %55 = arith.mulf %52, %54 : vector<8x256xf32>
    %c0_20 = arith.constant 0 : index
    %c0_21 = arith.constant 0 : index
    %56 = vector.load %arg5[%c0_20, %c0_21] : memref<8x1xf32, #tpu.memory_space<vmem>>, vector<8x1xf32>
    %57 = vector.broadcast %56 : vector<8x1xf32> to vector<8x256xf32>
    %58 = arith.addf %55, %57 : vector<8x256xf32>
    %cst_22 = arith.constant 0.000000e+00 : f32
    %59 = vector.broadcast %cst_22 : f32 to vector<8x256xf32>
    %60 = arith.maximumf %58, %59 : vector<8x256xf32>
    %c0_23 = arith.constant 0 : index
    %c0_24 = arith.constant 0 : index
    %c0_25 = arith.constant 0 : index
    %61 = vector.load %arg6[%c0_23, %c0_24, %c0_25] : memref<1x8x256xf32, #tpu.memory_space<vmem>>, vector<1x8x256xf32>
    %62 = vector.shape_cast %61 : vector<1x8x256xf32> to vector<8x256xf32>
    %63 = vector.shape_cast %60 : vector<8x256xf32> to vector<1x8x256xf32>
    tpu.vector_store %arg6[%c0_23, %c0_24, %c0_25], %63 {strides = array<i32>} : memref<1x8x256xf32, #tpu.memory_space<vmem>>, vector<1x8x256xf32>,
    return
  }
  func.func @transform_0(%arg0: i32) -> (i32, i32, i32) {
    %c0_i32 = arith.constant 0 : i32
    %c0_i32_0 = arith.constant 0 : i32
    %c0_i32_1 = arith.constant 0 : i32
    return %arg0, %c0_i32, %c0_i32_0 : i32, i32, i32
  }
  func.func @transform_1(%arg0: i32) -> (i32, i32) {
    %c0_i32 = arith.constant 0 : i32
    %c0_i32_0 = arith.constant 0 : i32
    %c0_i32_1 = arith.constant 0 : i32
    return %c0_i32, %c0_i32_0 : i32, i32
  }
  func.func @transform_2(%arg0: i32) -> (i32, i32) {
    %c0_i32 = arith.constant 0 : i32
    %c0_i32_0 = arith.constant 0 : i32
    %c0_i32_1 = arith.constant 0 : i32
    return %c0_i32, %c0_i32_0 : i32, i32
  }
  func.func @transform_3(%arg0: i32) -> (i32, i32) {
    %c0_i32 = arith.constant 0 : i32
    %c0_i32_0 = arith.constant 0 : i32
    %c0_i32_1 = arith.constant 0 : i32
    return %c0_i32, %c0_i32_0 : i32, i32
  }
  func.func @transform_4(%arg0: i32) -> (i32, i32) {
    %c0_i32 = arith.constant 0 : i32
    %c0_i32_0 = arith.constant 0 : i32
    %c0_i32_1 = arith.constant 0 : i32
    return %c0_i32, %c0_i32_0 : i32, i32
  }
  func.func @transform_5(%arg0: i32) -> (i32, i32, i32) {
    %c0_i32 = arith.constant 0 : i32
    %c0_i32_0 = arith.constant 0 : i32
    %c0_i32_1 = arith.constant 0 : i32
    return %arg0, %c0_i32, %c0_i32_0 : i32, i32, i32
  }
}

</mosaic_0001>

<llo_original>
// kernel: tpu_custom_call.1
$region0: #{tpu_custom_call.1}
  #allocation0 [shape = 'u32[]', space=smem, size = 0x4, offset = 0x4, fixed_abs, tag = 'smem constant byte address 0x4 - core index']
  #allocation1 [shape = 'u32[144,128]{1,0:T(1,128)}', space=vmem, size = 0x12000, scoped, tag = 'internal scratch']
  %s0 = inlined_call_operand.hbm [shape: f32[2,8,256], index: 0, kind: input, shape index: {}]
  %s1 = inlined_call_operand.vmem [shape: f32[8,72], index: 1, kind: input, shape index: {}]
  %s2 = inlined_call_operand.hbm [shape: f32[9,256], index: 2, kind: input, shape index: {}]
  %s3 = inlined_call_operand.vmem [shape: f32[8,1], index: 3, kind: input, shape index: {}]
  %s4 = inlined_call_operand.vmem [shape: f32[8,1], index: 4, kind: input, shape index: {}]
  %s5 = inlined_call_operand.hbm [shape: f32[2,8,256], index: 5, kind: output, shape index: {}]
  %s6 = sld [smem:[#allocation0]]
  $region61: #{tpu_custom_call.1} parent=0
    _
  %s8 = ssub.s32 1, %s6
  %s9 = scalar_select 0, %s8, %s6
  $region1: #{tpu_custom_call.1} parent=0
    #allocation2 [shape = 'u8[16384]{0}', space=vmem, size = 0x4000, scoped, tag = 'input window, operand 0']
    #allocation3 [shape = 's32[2]{0}', space=sflag, size = 0x8, scoped, tag = 'scoped memory for tpu_custom_call.1']
    #allocation4 [shape = 's32[2]{0}', space=sflag, size = 0x8, scoped, tag = 'scoped memory for tpu_custom_call.1']
    #allocation5 [shape = 'u8[16384]{0}', space=vmem, size = 0x4000, scoped, tag = 'input window, operand 2, single buffered']
    #allocation6 [shape = 's32[1]{0}', space=sflag, size = 0x4, scoped, tag = 'scoped memory for tpu_custom_call.1']
    #allocation7 [shape = 'u8[16384]{0}', space=vmem, size = 0x4000, scoped, tag = 'output window, operand 0']
    %10 = vsyncpa [#allocation3], 0
    %s11 = scalar_lea.sflag [#allocation3], 1
    %12 = vsyncpa %s11, 0
    %13 = vsyncpa [#allocation6], 0
    %14 = vsyncpa [#allocation4], 0
    %s15 = scalar_lea.sflag [#allocation4], 1
    %16 = vsyncpa %s15, 0
    loop: start=0, step=1, limit=4
    $region2: #{tpu_custom_call.1} parent=1 // loop_pre_header
      _
    $region3: #{tpu_custom_call.1} parent=1 // loop_header
      %s18 = sphi 0, %s22
      %p19 = scmp.ge.s32.totalorder %s18, 4
      %s28 = sphi 0, %s30
      %s31 = sphi 0, %s28
      %s32 = sphi 0, %s31
      %s48 = sphi 0, %s32
      %s52 = sphi 0, %s52
      %s54 = sphi 0, %s52
      %s55 = sphi 0, %s54
      %s69 = sphi 0, %s55
      %s73 = sphi 0, %s73
      %s75 = sphi 0, %s73
      %s76 = sphi 0, %s75
      %s90 = sphi 0, %s76
      %s94 = sphi 0, %s94
      %s96 = sphi 0, %s94
      %s97 = sphi 0, %s96
      %s111 = sphi 0, %s97
      %s115 = sphi 0, %s115
      %s117 = sphi 0, %s115
      %s118 = sphi 0, %s117
      %s132 = sphi 0, %s118
      %s138 = sphi 0, %s140
      %s141 = sphi 0, %s138
      %s142 = sphi 0, %s141
      %s158 = sphi 0, %s142
    $region4: #{tpu_custom_call.1} parent=1 // loop_header_branch
      %21 = sbr.rel (%p19) target = $region8
    $region5: #{tpu_custom_call.1} parent=1 // loop_body
      %s23 = ssub.s32 %s18, 1
      %s24 = ssub.s32 %s18, 2
      %s25 = sadd.s32 %s18, 1
      %s26 = ssub.s32 %s18, %s25
      %p27 = scmp.eq.s32.totalorder %s26, 0
      %s29 = sadd.s32 %s28, 1
      %s30 = scalar_select %p27, %s28, %s29
      %p33 = pneg %p27
      %p34 = scmp.eq.s32.totalorder %s18, 1
      %p35 = por %p33, %p34
      %p36 = scmp.ne.s32.totalorder %s28, %s31
      %p37 = scmp.eq.s32.totalorder %s18, 0
      %p38 = por %p36, %p37
      %p39 = scmp.ne.s32.totalorder %s28, %s31
      %p40 = scmp.eq.s32.totalorder %s23, 1
      %p41 = por %p39, %p40
      %p42 = scmp.ne.s32.totalorder %s31, %s32
      %p43 = scmp.eq.s32.totalorder %s23, 0
      %p44 = por %p42, %p43
      %p45 = scmp.ne.s32.totalorder %s31, %s32
      %p46 = scmp.eq.s32.totalorder %s24, 1
      %p47 = por %p45, %p46
      %p49 = scmp.ne.s32.totalorder %s32, %s48
      %p50 = scmp.eq.s32.totalorder %s24, 0
      %p51 = por %p49, %p50
      %s53 = sadd.s32 %s52, 1
      %p56 = scmp.eq.s32.totalorder %s18, 1
      %p57 = scmp.ne.s32.totalorder %s52, %s54
      %p58 = scmp.eq.s32.totalorder %s18, 0
      %p59 = por %p57, %p58
      %p60 = scmp.ne.s32.totalorder %s52, %s54
      %p61 = scmp.eq.s32.totalorder %s23, 1
      %p62 = por %p60, %p61
      %p63 = scmp.ne.s32.totalorder %s54, %s55
      %p64 = scmp.eq.s32.totalorder %s23, 0
      %p65 = por %p63, %p64
      %p66 = scmp.ne.s32.totalorder %s54, %s55
      %p67 = scmp.eq.s32.totalorder %s24, 1
      %p68 = por %p66, %p67
      %p70 = scmp.ne.s32.totalorder %s55, %s69
      %p71 = scmp.eq.s32.totalorder %s24, 0
      %p72 = por %p70, %p71
      %s74 = sadd.s32 %s73, 1
      %p77 = scmp.eq.s32.totalorder %s18, 1
      %p78 = scmp.ne.s32.totalorder %s73, %s75
      %p79 = scmp.eq.s32.totalorder %s18, 0
      %p80 = por %p78, %p79
      %p81 = scmp.ne.s32.totalorder %s73, %s75
      %p82 = scmp.eq.s32.totalorder %s23, 1
      %p83 = por %p81, %p82
      %p84 = scmp.ne.s32.totalorder %s75, %s76
      %p85 = scmp.eq.s32.totalorder %s23, 0
      %p86 = por %p84, %p85
      %p87 = scmp.ne.s32.totalorder %s75, %s76
      %p88 = scmp.eq.s32.totalorder %s24, 1
      %p89 = por %p87, %p88
      %p91 = scmp.ne.s32.totalorder %s76, %s90
      %p92 = scmp.eq.s32.totalorder %s24, 0
      %p93 = por %p91, %p92
      %s95 = sadd.s32 %s94, 1
      %p98 = scmp.eq.s32.totalorder %s18, 1
      %p99 = scmp.ne.s32.totalorder %s94, %s96
      %p100 = scmp.eq.s32.totalorder %s18, 0
      %p101 = por %p99, %p100
      %p102 = scmp.ne.s32.totalorder %s94, %s96
      %p103 = scmp.eq.s32.totalorder %s23, 1
      %p104 = por %p102, %p103
      %p105 = scmp.ne.s32.totalorder %s96, %s97
      %p106 = scmp.eq.s32.totalorder %s23, 0
      %p107 = por %p105, %p106
      %p108 = scmp.ne.s32.totalorder %s96, %s97
      %p109 = scmp.eq.s32.totalorder %s24, 1
      %p110 = por %p108, %p109
      %p112 = scmp.ne.s32.totalorder %s97, %s111
      %p113 = scmp.eq.s32.totalorder %s24, 0
      %p114 = por %p112, %p113
      %s116 = sadd.s32 %s115, 1
      %p119 = scmp.eq.s32.totalorder %s18, 1
      %p120 = scmp.ne.s32.totalorder %s115, %s117
      %p121 = scmp.eq.s32.totalorder %s18, 0
      %p122 = por %p120, %p121
      %p123 = scmp.ne.s32.totalorder %s115, %s117
      %p124 = scmp.eq.s32.totalorder %s23, 1
      %p125 = por %p123, %p124
      %p126 = scmp.ne.s32.totalorder %s117, %s118
      %p127 = scmp.eq.s32.totalorder %s23, 0
      %p128 = por %p126, %p127
      %p129 = scmp.ne.s32.totalorder %s117, %s118
      %p130 = scmp.eq.s32.totalorder %s24, 1
      %p131 = por %p129, %p130
      %p133 = scmp.ne.s32.totalorder %s118, %s132
      %p134 = scmp.eq.s32.totalorder %s24, 0
      %p135 = por %p133, %p134
      %s136 = ssub.s32 %s18, %s25
      %p137 = scmp.eq.s32.totalorder %s136, 0
      %s139 = sadd.s32 %s138, 1
      %s140 = scalar_select %p137, %s138, %s139
      %p143 = pneg %p137
      %p144 = scmp.eq.s32.totalorder %s18, 1
      %p145 = por %p143, %p144
      %p146 = scmp.ne.s32.totalorder %s138, %s141
      %p147 = scmp.eq.s32.totalorder %s18, 0
      %p148 = por %p146, %p147
      %p149 = scmp.ne.s32.totalorder %s138, %s141
      %p150 = scmp.eq.s32.totalorder %s23, 1
      %p151 = por %p149, %p150
      %p152 = scmp.ne.s32.totalorder %s141, %s142
      %p153 = scmp.eq.s32.totalorder %s23, 0
      %p154 = por %p152, %p153
      %p155 = scmp.ne.s32.totalorder %s141, %s142
      %p156 = scmp.eq.s32.totalorder %s24, 1
      %p157 = por %p155, %p156
      %p159 = scmp.ne.s32.totalorder %s142, %s158
      %p160 = scmp.eq.s32.totalorder %s24, 0
      %p161 = por %p159, %p160
      %p162 = scmp.le.s32.totalorder 1, %s18
      %p163 = scmp.lt.s32.totalorder %s18, 3
      %p164 = pnand %p162, %p163
      %p165 = pneg %p164
      // Predicated region
      $region9: #{tpu_custom_call.1} parent=5 // pred_check
        _
      $region10: #{tpu_custom_call.1} parent=5 // pred_check_branch
        %167 = sbr.rel (%p164) target = $region12
      $region11: #{tpu_custom_call.1} parent=5 // pred_region
        %s168 = ssub.s32 %s18, 1
        // Predicated region
        $region13: #{tpu_custom_call.1} parent=11 // pred_check
          %p169 = pneg %p65
        $region14: #{tpu_custom_call.1} parent=11 // pred_check_branch
          %171 = sbr.rel (%p169) target = $region16
        $region15: #{tpu_custom_call.1} parent=11 // pred_region
          _
        $region16: #{tpu_custom_call.1} parent=11 // pred_fallthru
          _
        // Predicated region
        $region17: #{tpu_custom_call.1} parent=11 // pred_check
          %p172 = pneg %p86
        $region18: #{tpu_custom_call.1} parent=11 // pred_check_branch
          %174 = sbr.rel (%p172) target = $region20
        $region19: #{tpu_custom_call.1} parent=11 // pred_region
          %s176 = ssub.s32 512, 512
          %177 = vsyncadd [#allocation6], %s176
          %s178 = sshll.u32 [#allocation5], 4
          %s179 = int_to_ptr.vmem [resolvable:$true] %s178
          %184 = dma.hbm_to_vmem [thread:$0]  %s2, 512, %s179, [#allocation6], 256, 256, 16
        $region20: #{tpu_custom_call.1} parent=11 // pred_fallthru
          _
        // Predicated region
        $region21: #{tpu_custom_call.1} parent=11 // pred_check
          %p185 = pneg %p107
        $region22: #{tpu_custom_call.1} parent=11 // pred_check_branch
          %187 = sbr.rel (%p185) target = $region24
        $region23: #{tpu_custom_call.1} parent=11 // pred_region
          _
        $region24: #{tpu_custom_call.1} parent=11 // pred_fallthru
          _
        // Predicated region
        $region25: #{tpu_custom_call.1} parent=11 // pred_check
          %p188 = pneg %p128
        $region26: #{tpu_custom_call.1} parent=11 // pred_check_branch
          %190 = sbr.rel (%p188) target = $region28
        $region27: #{tpu_custom_call.1} parent=11 // pred_region
          _
        $region28: #{tpu_custom_call.1} parent=11 // pred_fallthru
          _
      $region12: #{tpu_custom_call.1} parent=5 // pred_fallthru
        _
      %p191 = scmp.lt.s32.totalorder %s18, 2
      // Predicated region
      $region29: #{tpu_custom_call.1} parent=5 // pred_check
        %p192 = pneg %p191
      $region30: #{tpu_custom_call.1} parent=5 // pred_check_branch
        %194 = sbr.rel (%p192) target = $region32
      $region31: #{tpu_custom_call.1} parent=5 // pred_region
        // Predicated region
        $region33: #{tpu_custom_call.1} parent=31 // pred_check
          %p195 = pneg %p38
        $region34: #{tpu_custom_call.1} parent=31 // pred_check_branch
          %197 = sbr.rel (%p195) target = $region36
        $region35: #{tpu_custom_call.1} parent=31 // pred_region
          %s198 = sand.u32 %s28, 1
          %s199 = scalar_lea.sflag [#allocation3], %s198
          %s200 = sand.u32 %s28, 1
          %s201 = smul.addr %s200, 16
          %s202 = scalar_lea.vmem [#allocation2], %s201
          %s204 = ssub.s32 256, 256
          %205 = vsyncadd %s199, %s204
          %s206 = smul.addr %s18, 2
          %s207 = smul.addr %s206, 128
          %s208 = scalar_lea.hbm %s0, %s207
          %s210 = sshll.u32 %s202, 4
          %s211 = int_to_ptr.vmem [resolvable:$true] %s210
          %213 = dma.hbm_to_vmem [thread:$0]  %s208, 256, %s211, %s199
        $region36: #{tpu_custom_call.1} parent=31 // pred_fallthru
          _
      $region32: #{tpu_custom_call.1} parent=5 // pred_fallthru
        _
      %p214 = scmp.le.s32.totalorder 1, %s18
      %p215 = scmp.lt.s32.totalorder %s18, 3
      %p216 = pnand %p214, %p215
      %p217 = pneg %p216
      // Predicated region
      $region37: #{tpu_custom_call.1} parent=5 // pred_check
        _
      $region38: #{tpu_custom_call.1} parent=5 // pred_check_branch
        %219 = sbr.rel (%p216) target = $region40
      $region39: #{tpu_custom_call.1} parent=5 // pred_region
        %s220 = ssub.s32 %s18, 1
        %s221 = sand.u32 %s31, 1
        %s222 = scalar_lea.sflag [#allocation3], %s221
        %s223 = sand.u32 %s31, 1
        %s224 = smul.addr %s223, 16
        %s225 = scalar_lea.vmem [#allocation2], %s224
        // Predicated region
        $region41: #{tpu_custom_call.1} parent=39 // pred_check
          %p226 = pneg %p44
        $region42: #{tpu_custom_call.1} parent=39 // pred_check_branch
          %228 = sbr.rel (%p226) target = $region44
        $region43: #{tpu_custom_call.1} parent=39 // pred_region
          %229 = dma.done %s222, 256
        $region44: #{tpu_custom_call.1} parent=39 // pred_fallthru
          _
        // Predicated region
        $region45: #{tpu_custom_call.1} parent=39 // pred_check
          %p230 = pneg %p86
        $region46: #{tpu_custom_call.1} parent=39 // pred_check_branch
          %232 = sbr.rel (%p230) target = $region48
        $region47: #{tpu_custom_call.1} parent=39 // pred_region
          %233 = dma.done [#allocation6], 512
        $region48: #{tpu_custom_call.1} parent=39 // pred_fallthru
          _
        %s234 = sand.u32 %s31, 1
        %s235 = scalar_lea.sflag [#allocation3], %s234
        %s236 = sand.u32 %s31, 1
        %s237 = smul.addr %s236, 16
        %s238 = scalar_lea.vmem [#allocation2], %s237
        %p239 = pneg %p44
        %p240 = pneg %p41
        %p241 = pneg %p65
        %p242 = pneg %p62
        %p243 = pneg %p86
        %p244 = pneg %p83
        %p245 = pneg %p107
        %p246 = pneg %p104
        %p247 = pneg %p128
        %p248 = pneg %p125
        %p249 = pneg %p154
        %p250 = pneg %p151
        %s251 = sand.u32 %s141, 1
        %s252 = scalar_lea.sflag [#allocation4], %s251
        %s253 = sand.u32 %s141, 1
        %s254 = smul.addr %s253, 16
        %s255 = scalar_lea.vmem [#allocation7], %s254
        %v256 = vld [vmem:[%s225] sm:$0xff]
        %v257 = vld [vmem:[%s225 + $0x8] sm:$0xff]
        %258 = vrot.lane.b32.xlu0 %v256, 17
        %v259 = vpop.permute.xlu0 %258
        %260 = vrot.lane.b32.xlu0 %v257, 17
        %v261 = vpop.permute.xlu0 %260
        %v262 = vlaneseq
        %v263 = vand.u32 %v262, 127
        %vm264 = vcmp.lt.s32.totalorder %v263, 17
        %v265 = vsel %vm264, %v259, %v261
        %v266 = vsel %vm264, %v261, %v259
        %v267 = vld [vmem:[#allocation5] ss:$8 sm:$0x3]
        %v269 = vlaneseq
        %v270 = vshrl.u32 %v269, 7
        %v271 = vsub.s32 0, %v270
        %v272 = vrot.slane %v267, %v271
        %v273 = vlaneseq
        %v274 = vshrl.u32 %v273, 7
        %v275 = vsub.s32 1, %v274
        %v276 = vrot.slane %v267, %v275
        %v279 = vmul.f32 %v266, %v272
        %v280 = vmul.f32 %v265, %v276
        %281 = vrot.lane.b32.xlu0 %v256, 16
        %v282 = vpop.permute.xlu0 %281
        %283 = vrot.lane.b32.xlu0 %v257, 16
        %v284 = vpop.permute.xlu0 %283
        %vm285 = vcmp.lt.s32.totalorder %v263, 16
        %v286 = vsel %vm285, %v282, %v284
        %v287 = vsel %vm285, %v284, %v282
        %s288 = scalar_lea.vmem [#allocation5], 1
        %v289 = vld [vmem:[%s288] ss:$8 sm:$0x3]
        %v291 = vlaneseq
        %v292 = vshrl.u32 %v291, 7
        %v293 = vsub.s32 0, %v292
        %v294 = vrot.slane %v289, %v293
        %v295 = vlaneseq
        %v296 = vshrl.u32 %v295, 7
        %v297 = vsub.s32 1, %v296
        %v298 = vrot.slane %v289, %v297
        %v301 = vmul.f32 %v287, %v294
        %v302 = vmul.f32 %v286, %v298
        %303 = vrot.lane.b32.xlu0 %v256, 15
        %v304 = vpop.permute.xlu0 %303
        %305 = vrot.lane.b32.xlu0 %v257, 15
        %v306 = vpop.permute.xlu0 %305
        %vm307 = vcmp.lt.s32.totalorder %v263, 15
        %v308 = vsel %vm307, %v304, %v306
        %v309 = vsel %vm307, %v306, %v304
        %s310 = scalar_lea.vmem [#allocation5], 2
        %v311 = vld [vmem:[%s310] ss:$8 sm:$0x3]
        %v313 = vlaneseq
        %v314 = vshrl.u32 %v313, 7
        %v315 = vsub.s32 0, %v314
        %v316 = vrot.slane %v311, %v315
        %v317 = vlaneseq
        %v318 = vshrl.u32 %v317, 7
        %v319 = vsub.s32 1, %v318
        %v320 = vrot.slane %v311, %v319
        %v323 = vmul.f32 %v309, %v316
        %v324 = vmul.f32 %v308, %v320
        %325 = vrot.lane.b32.xlu0 %v256, 1
        %v326 = vpop.permute.xlu0 %325
        %327 = vrot.lane.b32.xlu0 %v257, 1
        %v328 = vpop.permute.xlu0 %327
        %vm329 = vcmp.lt.s32.totalorder %v263, 1
        %v330 = vsel %vm329, %v326, %v328
        %v331 = vsel %vm329, %v328, %v326
        %s332 = scalar_lea.vmem [#allocation5], 3
        %v333 = vld [vmem:[%s332] ss:$8 sm:$0x3]
        %v335 = vlaneseq
        %v336 = vshrl.u32 %v335, 7
        %v337 = vsub.s32 0, %v336
        %v338 = vrot.slane %v333, %v337
        %v339 = vlaneseq
        %v340 = vshrl.u32 %v339, 7
        %v341 = vsub.s32 1, %v340
        %v342 = vrot.slane %v333, %v341
        %v345 = vmul.f32 %v331, %v338
        %v346 = vmul.f32 %v330, %v342
        %347 = vrot.lane.b32.xlu0 %v256, 127
        %v348 = vpop.permute.xlu0 %347
        %349 = vrot.lane.b32.xlu0 %v257, 127
        %v350 = vpop.permute.xlu0 %349
        %vm351 = vcmp.lt.s32.totalorder %v263, 127
        %v352 = vsel %vm351, %v348, %v350
        %v353 = vsel %vm351, %v350, %v348
        %s354 = scalar_lea.vmem [#allocation5], 5
        %v355 = vld [vmem:[%s354] ss:$8 sm:$0x3]
        %v357 = vlaneseq
        %v358 = vshrl.u32 %v357, 7
        %v359 = vsub.s32 0, %v358
        %v360 = vrot.slane %v355, %v359
        %v361 = vlaneseq
        %v362 = vshrl.u32 %v361, 7
        %v363 = vsub.s32 1, %v362
        %v364 = vrot.slane %v355, %v363
        %v367 = vmul.f32 %v352, %v360
        %v368 = vmul.f32 %v353, %v364
        %369 = vrot.lane.b32.xlu0 %v256, 113
        %v370 = vpop.permute.xlu0 %369
        %371 = vrot.lane.b32.xlu0 %v257, 113
        %v372 = vpop.permute.xlu0 %371
        %vm373 = vcmp.lt.s32.totalorder %v263, 113
        %v374 = vsel %vm373, %v370, %v372
        %v375 = vsel %vm373, %v372, %v370
        %s376 = scalar_lea.vmem [#allocation5], 6
        %v377 = vld [vmem:[%s376] ss:$8 sm:$0x3]
        %v379 = vlaneseq
        %v380 = vshrl.u32 %v379, 7
        %v381 = vsub.s32 0, %v380
        %v382 = vrot.slane %v377, %v381
        %v383 = vlaneseq
        %v384 = vshrl.u32 %v383, 7
        %v385 = vsub.s32 1, %v384
        %v386 = vrot.slane %v377, %v385
        %v389 = vmul.f32 %v374, %v382
        %v390 = vmul.f32 %v375, %v386
        %391 = vrot.lane.b32.xlu0 %v256, 112
        %v392 = vpop.permute.xlu0 %391
        %393 = vrot.lane.b32.xlu0 %v257, 112
        %v394 = vpop.permute.xlu0 %393
        %vm395 = vcmp.lt.s32.totalorder %v263, 112
        %v396 = vsel %vm395, %v392, %v394
        %v397 = vsel %vm395, %v394, %v392
        %s398 = scalar_lea.vmem [#allocation5], 7
        %v399 = vld [vmem:[%s398] ss:$8 sm:$0x3]
        %v401 = vlaneseq
        %v402 = vshrl.u32 %v401, 7
        %v403 = vsub.s32 0, %v402
        %v404 = vrot.slane %v399, %v403
        %v405 = vlaneseq
        %v406 = vshrl.u32 %v405, 7
        %v407 = vsub.s32 1, %v406
        %v408 = vrot.slane %v399, %v407
        %v411 = vmul.f32 %v396, %v404
        %v412 = vmul.f32 %v397, %v408
        %413 = vrot.lane.b32.xlu0 %v256, 111
        %v414 = vpop.permute.xlu0 %413
        %415 = vrot.lane.b32.xlu0 %v257, 111
        %v416 = vpop.permute.xlu0 %415
        %vm417 = vcmp.lt.s32.totalorder %v263, 111
        %v418 = vsel %vm417, %v414, %v416
        %v419 = vsel %vm417, %v416, %v414
        %s420 = scalar_lea.vmem [#allocation5], 16
        %v421 = vld [vmem:[%s420] ss:$8 sm:$0x3]
        %v423 = vlaneseq
        %v424 = vshrl.u32 %v423, 7
        %v425 = vsub.s32 0, %v424
        %v426 = vrot.slane %v421, %v425
        %v427 = vlaneseq
        %v428 = vshrl.u32 %v427, 7
        %v429 = vsub.s32 1, %v428
        %v430 = vrot.slane %v421, %v429
        %v433 = vmul.f32 %v418, %v426
        %v434 = vmul.f32 %v419, %v430
        %v435 = vld [vmem:[%s1] sm:$0xff]
        %vm436 = vcmask 588800
        %v438 = vsel %vm436, %v435, 0
        %440 = vmatprep.subr.mxu0 %v280
        %441 = vmatpush1.msra.mxu0 %v279
        %442 = vmatprep.subr.mxu0 %v302
        %443 = vmatpush1.msra.mxu0 %v301
        %444 = vmatprep.subr.mxu0 %v324
        %445 = vmatpush1.msra.mxu0 %v323
        %446 = vmatprep.subr.mxu0 %v346
        %447 = vmatpush1.msra.mxu0 %v345
        %448 = vmatprep.subr.mxu0 %v257
        %449 = vmatpush1.msra.mxu0 %v256
        %450 = vmatprep.subr.mxu0 %v368
        %451 = vmatpush1.msra.mxu0 %v367
        %452 = vmatprep.subr.mxu0 %v390
        %453 = vmatpush1.msra.mxu0 %v389
        %454 = vmatprep.subr.mxu0 %v412
        %455 = vmatpush1.msra.mxu0 %v411
        %456 = vmatprep.subr.mxu0 %v434
        %457 = vmatpush1.msra.mxu0 %v433
        %458 = vmatprep.subr.mxu0 0.0
        %459 = vmatpush1.msra.mxu0 0.0
        %460 = vmatprep.subr.mxu0 0.0
        %461 = vmatpush1.msra.mxu0 0.0
        %462 = vmatprep.subr.mxu0 0.0
        %463 = vmatpush1.msra.mxu0 0.0
        %464 = vmatprep.subr.mxu0 0.0
        %465 = vmatpush1.msra.mxu0 0.0
        %466 = vmatprep.subr.mxu0 0.0
        %467 = vmatpush1.msra.mxu0 0.0
        %468 = vmatprep.subr.mxu0 0.0
        %469 = vmatpush1.msra.mxu0 0.0
        %470 = vmatprep.subr.mxu0 0.0
        %471 = vmatpush1.msra.mxu0 0.0
        %472 = vmatprep.subr.mxu0 0.0
        %473 = vmatpush1.msra.mxu0 0.0
        %474 = vmatprep.subr.mxu0 0.0
        %475 = vmatpush1.msra.mxu0 0.0
        %476 = vmatprep.subr.mxu0 0.0
        %477 = vmatpush1.msra.mxu0 0.0
        %478 = vmatprep.subr.mxu0 0.0
        %479 = vmatpush1.msra.mxu0 0.0
        %480 = vmatprep.subr.mxu0 0.0
        %481 = vmatpush1.msra.mxu0 0.0
        %482 = vmatprep.subr.mxu0 0.0
        %483 = vmatpush1.msra.mxu0 0.0
        %484 = vmatprep.subr.mxu0 0.0
        %485 = vmatpush1.msra.mxu0 0.0
        %486 = vmatprep.subr.mxu0 0.0
        %487 = vmatpush1.msra.mxu0 0.0
        %488 = vmatprep.subr.mxu0 0.0
        %489 = vmatpush1.msra.mxu0 0.0
        %490 = vmatprep.subr.mxu0 0.0
        %491 = vmatpush1.msra.mxu0 0.0
        %492 = vmatprep.subr.mxu0 0.0
        %493 = vmatpush1.msra.mxu0 0.0
        %494 = vmatprep.subr.mxu0 0.0
        %495 = vmatpush1.msra.mxu0 0.0
        %496 = vmatprep.subr.mxu0 0.0
        %497 = vmatpush1.msra.mxu0 0.0
        %498 = vmatprep.subr.mxu0 0.0
        %499 = vmatpush1.msra.mxu0 0.0
        %500 = vmatprep.subr.mxu0 0.0
        %501 = vmatpush1.msra.mxu0 0.0
        %502 = vmatprep.subr.mxu0 0.0
        %503 = vmatpush1.msra.mxu0 0.0
        %504 = vmatprep.mubr.f32.mxu0 0.0
        %505 = vmatmul.mubr.f32.gmra.mrb[0].mxu0 %v438
        %v506 = vpop.f32.mrb[0].mxu0
        %v507 = vadd.f32 0.0, %v506
        %v508 = vpop.f32.mrb[0].mxu0
        %v509 = vadd.f32 0.0, %v508
        %510 = vdwg.mxu0
        %v511 = vadd.f32 %v507, %v509
        %512 = vadd.xlane.f32.xlu0 %v511
        %v513 = vpop.xlane.xlu0 %512
        %v514 = vrcp.pop 256.0
        %v515 = vmul.f32 %v513, %v514
        %v516 = vsub.f32 %v507, %v515
        %v517 = vsub.f32 %v509, %v515
        %v518 = vmul.f32 %v516, %v516
        %v519 = vmul.f32 %v517, %v517
        %v520 = vadd.f32 %v518, %v519
        %521 = vadd.xlane.f32.xlu0 %v520
        %v522 = vpop.xlane.xlu0 %521
        %v523 = vmul.f32 %v522, %v514
        %v524 = vadd.f32 %v523, 1e-05
        %v525 = vrsqrt.pop %v524
        %v526 = vmul.f32 %v516, %v525
        %v527 = vmul.f32 %v517, %v525
        %v528 = vld [vmem:[%s3] sm:$0xff]
        %530 = vset.pattern.permute.xlu0 0
        %531 = vperm.xlu0 %530, %v528
        %v532 = vpop.permute.xlu0 %531
        %v534 = vmul.f32 %v526, %v532
        %v535 = vmul.f32 %v527, %v532
        %v536 = vld [vmem:[%s4] sm:$0xff]
        %538 = vset.pattern.permute.xlu0 0
        %539 = vperm.xlu0 %538, %v536
        %v540 = vpop.permute.xlu0 %539
        %v542 = vadd.f32 %v534, %v540
        %v543 = vadd.f32 %v535, %v540
        %v544 = vmax.f32 %v542, 0.0
        %v545 = vmax.f32 %v543, 0.0
        %546 = vst [vmem:[%s255] sm:$0xff] %v544
        %547 = vst [vmem:[%s255 + $0x8] sm:$0xff] %v545
        %s548 = sand.u32 %s141, 1
        %s549 = scalar_lea.sflag [#allocation4], %s548
        %s550 = sand.u32 %s141, 1
        %s551 = smul.addr %s550, 16
        %s552 = scalar_lea.vmem [#allocation7], %s551
        // Predicated region
        $region49: #{tpu_custom_call.1} parent=39 // pred_check
          %p553 = pneg %p151
        $region50: #{tpu_custom_call.1} parent=39 // pred_check_branch
          %555 = sbr.rel (%p553) target = $region52
        $region51: #{tpu_custom_call.1} parent=39 // pred_region
          %s557 = ssub.s32 256, 256
          %558 = vsyncadd %s549, %s557
          %s559 = smul.addr %s23, 2
          %s560 = smul.addr %s559, 128
          %s561 = scalar_lea.hbm %s5, %s560
          %s563 = sshll.u32 %s552, 4
          %s564 = int_to_ptr.vmem [resolvable:$true] %s563
          %566 = dma.vmem_to_hbm [thread:$0]  %s564, 256, %s561, %s549
        $region52: #{tpu_custom_call.1} parent=39 // pred_fallthru
          _
      $region40: #{tpu_custom_call.1} parent=5 // pred_fallthru
        _
      %p567 = scmp.le.s32.totalorder 2, %s18
      // Predicated region
      $region53: #{tpu_custom_call.1} parent=5 // pred_check
        %p568 = pneg %p567
      $region54: #{tpu_custom_call.1} parent=5 // pred_check_branch
        %570 = sbr.rel (%p568) target = $region56
      $region55: #{tpu_custom_call.1} parent=5 // pred_region
        %s571 = ssub.s32 %s18, 2
        // Predicated region
        $region57: #{tpu_custom_call.1} parent=55 // pred_check
          %p572 = pneg %p157
        $region58: #{tpu_custom_call.1} parent=55 // pred_check_branch
          %574 = sbr.rel (%p572) target = $region60
        $region59: #{tpu_custom_call.1} parent=55 // pred_region
          %s575 = sand.u32 %s142, 1
          %s576 = scalar_lea.sflag [#allocation4], %s575
          %s577 = sand.u32 %s142, 1
          %s578 = smul.addr %s577, 16
          %s579 = scalar_lea.vmem [#allocation7], %s578
          %580 = dma.done %s576, 256
        $region60: #{tpu_custom_call.1} parent=55 // pred_fallthru
          _
      $region56: #{tpu_custom_call.1} parent=5 // pred_fallthru
        _
    $region6: #{tpu_custom_call.1} parent=1 // loop_footer
      %s22 = sadd.s32 1, %s18
    $region7: #{tpu_custom_call.1} parent=1 // loop_footer_branch
      %17 = sbr.rel target = $region3
    $region8: #{tpu_custom_call.1} parent=1 // loop_exit
      _
    %581 = vsyncpa [#allocation3], 1
    %s582 = scalar_lea.sflag [#allocation3], 1
    %583 = vsyncpa %s582, 1
    %584 = vsyncpa [#allocation6], 1
    %585 = vsyncpa [#allocation4], 1
    %s586 = scalar_lea.sflag [#allocation4], 1
    %587 = vsyncpa %s586, 1

</llo_original>
